<compile_context>
chip_gen: v5e
topology: v5e:2x2
jax: 0.10.0
libtpu: 0.0.40
codegen_flags: <defaults>
</compile_context>

<pallas_src>
import functools
import numpy as np

import jax
import jax.numpy as jnp
from jax.experimental import pallas as pl
from jax.experimental.pallas import tpu as pltpu

_LOG2 = float(np.log(2.0))


def _round_up(v, m):
    return (v + m - 1) // m * m


def _graph_pooling_kernel(hidden,
                          x_ref, batch_ref,
                          w1_ref, b1_ref,
                          w2_ref, b2_ref,
                          w3_ref, b3_ref,
                          out_ref, acc_ref):
    i = pl.program_id(0)

    @pl.when(i == 0)
    def _init():
        acc_ref[...] = jnp.zeros_like(acc_ref)

    x = x_ref[...]                                                    # [TN, H]

    # lin1 + ShiftedSoftplus (stable: max(h,0) + log1p(exp(-|h|)) - log 2)
    h = jnp.dot(x, w1_ref[...], preferred_element_type=jnp.float32) + b1_ref[...]
    h = jnp.maximum(h, 0.0) + jnp.log1p(jnp.exp(-jnp.abs(h))) - _LOG2

    # lin2
    h = jnp.dot(h, w2_ref[...], preferred_element_type=jnp.float32) + b2_ref[...]

    # Per-tile scatter-sum on the MXU: (G_pad x TN) one-hot @ (TN x (H+1)),
    # where the extra ones column carries the per-graph node counts.
    batch = batch_ref[...]                                            # [1, TN]
    tn = batch.shape[1]
    g_pad = acc_ref.shape[0]
    gid = jax.lax.broadcasted_iota(jnp.int32, (g_pad, tn), 0)         # [G_pad, TN]
    onehot = (batch == gid).astype(jnp.float32)                       # [G_pad, TN]
    hp = jnp.concatenate([h, jnp.ones((tn, 1), jnp.float32)], axis=-1)  # [TN, H+1]
    acc_ref[...] += jnp.dot(onehot, hp, preferred_element_type=jnp.float32)

    @pl.when(i == pl.num_programs(0) - 1)
    def _finalize():
        acc = acc_ref[...]
        sums = acc[:, :hidden]                                        # [G_pad, H]
        counts = acc[:, hidden:hidden + 1]                            # [G_pad, 1]
        means = sums / jnp.maximum(counts, 1.0)
        out = jnp.dot(means, w3_ref[...],
                      preferred_element_type=jnp.float32) + b3_ref[...]
        out_ref[...] = out.astype(out_ref.dtype)


def graph_pooling(x, batch, params, num_graphs, *, node_tile=256):
    n, hidden = x.shape
    out_dim = params["w3"].shape[1]

    tn = node_tile
    n_pad = _round_up(max(n, tn), tn)
    g_pad = _round_up(max(num_graphs, 1), 8)
    out_pad = _round_up(out_dim, 128)

    # Pad nodes; padded rows get batch id -1 so the one-hot drops them.
    x_p = jnp.zeros((n_pad, hidden), jnp.float32).at[:n, :].set(
        x.astype(jnp.float32))
    batch_p = jnp.full((1, n_pad), -1, jnp.int32).at[0, :n].set(
        batch.astype(jnp.int32))

    # Lane-pad the output projection so the final store is lane-dense.
    w3_p = jnp.zeros((hidden, out_pad), jnp.float32).at[:, :out_dim].set(
        params["w3"].astype(jnp.float32))
    b3_p = jnp.zeros((1, out_pad), jnp.float32).at[:, :out_dim].set(
        params["b3"].astype(jnp.float32))

    num_tiles = n_pad // tn

    # Explicit VMEM budget (doubled for margin, floor 4 MiB) -- sized against
    # the tile shapes, not the 128 MiB of v5e/v6e (v7x has 64 MiB physical).
    vmem_limit = int(
        2 * tn * max(hidden, 128) * 4          # double-buffered x tile
        + 2 * 8 * tn * 4                       # batch tile (sublane padded)
        + 2 * 2 * hidden * max(hidden, 128) * 4  # w1, w2
        + 2 * hidden * out_pad * 4             # w3
        + 2 * 8 * max(hidden, 128) * 4         # b1, b2
        + 2 * 8 * out_pad * 4                  # b3
        + 2 * g_pad * out_pad * 4              # output block
        + g_pad * _round_up(hidden + 1, 128) * 4  # accumulator scratch
    ) * 2
    vmem_limit = max(vmem_limit, 4 * 1024 * 1024)

    kernel = functools.partial(_graph_pooling_kernel, hidden)
    out = pl.pallas_call(
        kernel,
        out_shape=jax.ShapeDtypeStruct((g_pad, out_pad), jnp.float32),
        grid=(num_tiles,),
        in_specs=[
            pl.BlockSpec((tn, hidden), lambda i: (i, 0)),        # x tile
            pl.BlockSpec((1, tn), lambda i: (0, i)),             # batch tile
            pl.BlockSpec((hidden, hidden), lambda i: (0, 0)),    # w1
            pl.BlockSpec((1, hidden), lambda i: (0, 0)),         # b1
            pl.BlockSpec((hidden, hidden), lambda i: (0, 0)),    # w2
            pl.BlockSpec((1, hidden), lambda i: (0, 0)),         # b2
            pl.BlockSpec((hidden, out_pad), lambda i: (0, 0)),   # w3 (padded)
            pl.BlockSpec((1, out_pad), lambda i: (0, 0)),        # b3 (padded)
        ],
        out_specs=pl.BlockSpec((g_pad, out_pad), lambda i: (0, 0)),
        scratch_shapes=[pltpu.VMEM((g_pad, hidden + 1), jnp.float32)],
        compiler_params=pltpu.CompilerParams(
            dimension_semantics=("arbitrary",),   # reduction axis (accumulator)
            vmem_limit_bytes=vmem_limit),
    )(x_p, batch_p,
      params["w1"], params["b1"],
      params["w2"], params["b2"],
      w3_p, b3_p)

    return out[:num_graphs, :out_dim]


def _reference(x, batch, params, num_graphs):
    h = x @ params["w1"] + params["b1"]
    h = jax.nn.softplus(h) - jnp.log(2.0)
    h = h @ params["w2"] + params["b2"]
    onehot = jax.nn.one_hot(batch, num_graphs, dtype=jnp.float32).T   # [G, N]
    means = (onehot @ h) / jnp.maximum(onehot.sum(axis=1, keepdims=True), 1.0)
    return means @ params["w3"] + params["b3"]


if __name__ == "__main__":
    # Small-but-real shapes: N=512 nodes, hidden_channels=32, out_dim=8,
    # num_graphs=8, node tile=256 -> 2 grid steps (exercises accumulation).
    N, H, OUT_DIM, G = 512, 32, 8, 8

    key = jax.random.PRNGKey(0)
    kx, k1, k2, k3, kb1, kb2, kb3 = jax.random.split(key, 7)

    x = jax.random.normal(kx, (N, H), dtype=jnp.float32)
    batch = jnp.repeat(jnp.arange(G, dtype=jnp.int32), N // G)

    params = {
        "w1": jax.random.normal(k1, (H, H), dtype=jnp.float32) * 0.1,
        "b1": jax.random.normal(kb1, (1, H), dtype=jnp.float32) * 0.01,
        "w2": jax.random.normal(k2, (H, H), dtype=jnp.float32) * 0.1,
        "b2": jax.random.normal(kb2, (1, H), dtype=jnp.float32) * 0.01,
        "w3": jax.random.normal(k3, (H, OUT_DIM), dtype=jnp.float32) * 0.1,
        "b3": jax.random.normal(kb3, (1, OUT_DIM), dtype=jnp.float32) * 0.01,
    }

    out = graph_pooling(x, batch, params, G, node_tile=256)
    out = jax.block_until_ready(out)

    ref = _reference(x, batch, params, G)
    np.testing.assert_allclose(np.asarray(out), np.asarray(ref),
                               rtol=1e-4, atol=1e-4)
    print("KERNEL_OK")
</pallas_src>

<mosaic_0001>
module attributes {stable_mosaic.version = 11 : i64} {
  func.func @_graph_pooling_kernel(%arg0: i32, %arg1: memref<256x32xf32, #tpu.memory_space<vmem>>, %arg2: memref<1x256xi32, #tpu.memory_space<vmem>>, %arg3: memref<32x32xf32, #tpu.memory_space<vmem>>, %arg4: memref<1x32xf32, #tpu.memory_space<vmem>>, %arg5: memref<32x32xf32, #tpu.memory_space<vmem>>, %arg6: memref<1x32xf32, #tpu.memory_space<vmem>>, %arg7: memref<32x128xf32, #tpu.memory_space<vmem>>, %arg8: memref<1x128xf32, #tpu.memory_space<vmem>>, %arg9: memref<8x128xf32, #tpu.memory_space<vmem>>, %arg10: memref<8x33xf32, #tpu.memory_space<vmem>>) attributes {dimension_semantics = [#tpu.dimension_semantics<arbitrary>], iteration_bounds = array<i64: 2>, scalar_prefetch = 0 : i64, scratch_operands = 1 : i64, tpu.core_type = #tpu.core_type<tc>, window_params = [{transform_indices = @transform_0, window_bounds = array<i64: 256, 32>}, {transform_indices = @transform_1, window_bounds = array<i64: 1, 256>}, {pipeline_mode = #tpu.pipeline_mode<synchronous>, transform_indices = @transform_2, window_bounds = array<i64: 32, 32>}, {pipeline_mode = #tpu.pipeline_mode<synchronous>, transform_indices = @transform_3, window_bounds = array<i64: 1, 32>}, {pipeline_mode = #tpu.pipeline_mode<synchronous>, transform_indices = @transform_4, window_bounds = array<i64: 32, 32>}, {pipeline_mode = #tpu.pipeline_mode<synchronous>, transform_indices = @transform_5, window_bounds = array<i64: 1, 32>}, {pipeline_mode = #tpu.pipeline_mode<synchronous>, transform_indices = @transform_6, window_bounds = array<i64: 32, 128>}, {pipeline_mode = #tpu.pipeline_mode<synchronous>, transform_indices = @transform_7, window_bounds = array<i64: 1, 128>}, {pipeline_mode = #tpu.pipeline_mode<synchronous>, transform_indices = @transform_8, window_bounds = array<i64: 8, 128>}]} {
    %c0_i32 = arith.constant 0 : i32
    %0 = arith.cmpi eq, %arg0, %c0_i32 : i32
    %1 = arith.extui %0 : i1 to i32
    %c0_i32_0 = arith.constant 0 : i32
    %2 = arith.cmpi ne, %1, %c0_i32_0 : i32
    scf.if %2 {
      %cst_23 = arith.constant 0.000000e+00 : f32
      %39 = vector.broadcast %cst_23 : f32 to vector<8x33xf32>
      %c0_24 = arith.constant 0 : index
      %c0_25 = arith.constant 0 : index
      %40 = vector.load %arg10[%c0_24, %c0_25] : memref<8x33xf32, #tpu.memory_space<vmem>>, vector<8x33xf32>
      tpu.vector_store %arg10[%c0_24, %c0_25], %39 {strides = array<i32>} : memref<8x33xf32, #tpu.memory_space<vmem>>, vector<8x33xf32>,
    } else {
    }
    %c0 = arith.constant 0 : index
    %c0_1 = arith.constant 0 : index
    %3 = vector.load %arg1[%c0, %c0_1] : memref<256x32xf32, #tpu.memory_space<vmem>>, vector<256x32xf32>
    %c0_2 = arith.constant 0 : index
    %c0_3 = arith.constant 0 : index
    %4 = vector.load %arg3[%c0_2, %c0_3] : memref<32x32xf32, #tpu.memory_space<vmem>>, vector<32x32xf32>
    %cst = arith.constant dense<0.000000e+00> : vector<256x32xf32>
    %5 = tpu.matmul %3, %4, %cst {dimension_numbers = #tpu.dot_dimension_numbers<[1], [0], [0], [1], [0, 0, 1, 1], [], []>} : vector<256x32xf32>, vector<32x32xf32>, vector<256x32xf32> -> vector<256x32xf32>
    %c0_4 = arith.constant 0 : index
    %c0_5 = arith.constant 0 : index
    %6 = vector.load %arg4[%c0_4, %c0_5] : memref<1x32xf32, #tpu.memory_space<vmem>>, vector<1x32xf32>
    %7 = vector.broadcast %6 : vector<1x32xf32> to vector<256x32xf32>
    %8 = arith.addf %5, %7 : vector<256x32xf32>
    %cst_6 = arith.constant 0.000000e+00 : f32
    %9 = vector.broadcast %cst_6 : f32 to vector<256x32xf32>
    %10 = arith.maximumf %8, %9 : vector<256x32xf32>
    %11 = math.absf %8 : vector<256x32xf32>
    %cst_7 = arith.constant 0.000000e+00 : f32
    %12 = vector.broadcast %cst_7 : f32 to vector<256x32xf32>
    %13 = arith.subf %12, %11 : vector<256x32xf32>
    %14 = math.exp %13 : vector<256x32xf32>
    %15 = math.log1p %14 : vector<256x32xf32>
    %16 = arith.addf %10, %15 : vector<256x32xf32>
    %cst_8 = arith.constant 0.693147182 : f32
    %17 = vector.broadcast %cst_8 : f32 to vector<256x32xf32>
    %18 = arith.subf %16, %17 : vector<256x32xf32>
    %c0_9 = arith.constant 0 : index
    %c0_10 = arith.constant 0 : index
    %19 = vector.load %arg5[%c0_9, %c0_10] : memref<32x32xf32, #tpu.memory_space<vmem>>, vector<32x32xf32>
    %cst_11 = arith.constant dense<0.000000e+00> : vector<256x32xf32>
    %20 = tpu.matmul %18, %19, %cst_11 {dimension_numbers = #tpu.dot_dimension_numbers<[1], [0], [0], [1], [0, 0, 1, 1], [], []>} : vector<256x32xf32>, vector<32x32xf32>, vector<256x32xf32> -> vector<256x32xf32>
    %c0_12 = arith.constant 0 : index
    %c0_13 = arith.constant 0 : index
    %21 = vector.load %arg6[%c0_12, %c0_13] : memref<1x32xf32, #tpu.memory_space<vmem>>, vector<1x32xf32>
    %22 = vector.broadcast %21 : vector<1x32xf32> to vector<256x32xf32>
    %23 = arith.addf %20, %22 : vector<256x32xf32>
    %c0_14 = arith.constant 0 : index
    %c0_15 = arith.constant 0 : index
    %24 = vector.load %arg2[%c0_14, %c0_15] : memref<1x256xi32, #tpu.memory_space<vmem>>, vector<1x256xi32>
    %25 = tpu.iota {dimensions = array<i32: 0>} : vector<8x256xi32>
    %26 = vector.broadcast %24 : vector<1x256xi32> to vector<8x256xi32>
    %27 = arith.cmpi eq, %26, %25 : vector<8x256xi32>
    %28 = arith.extui %27 : vector<8x256xi1> to vector<8x256xi32>
    %29 = arith.sitofp %28 : vector<8x256xi32> to vector<8x256xf32>
    %cst_16 = arith.constant 1.000000e+00 : f32
    %30 = vector.broadcast %cst_16 : f32 to vector<256x1xf32>
    %31 = tpu.concatenate %23, %30 in 1 : vector<256x32xf32>, vector<256x1xf32> -> vector<256x33xf32>
    %c0_17 = arith.constant 0 : index
    %c0_18 = arith.constant 0 : index
    %32 = vector.load %arg10[%c0_17, %c0_18] : memref<8x33xf32, #tpu.memory_space<vmem>>, vector<8x33xf32>
    %cst_19 = arith.constant dense<0.000000e+00> : vector<8x33xf32>
    %33 = tpu.matmul %29, %31, %cst_19 {dimension_numbers = #tpu.dot_dimension_numbers<[1], [0], [0], [1], [0, 0, 1, 1], [], []>} : vector<8x256xf32>, vector<256x33xf32>, vector<8x33xf32> -> vector<8x33xf32>
    %34 = arith.addf %32, %33 : vector<8x33xf32>
    %c0_20 = arith.constant 0 : index
    %c0_21 = arith.constant 0 : index
    %35 = vector.load %arg10[%c0_20, %c0_21] : memref<8x33xf32, #tpu.memory_space<vmem>>, vector<8x33xf32>
    tpu.vector_store %arg10[%c0_20, %c0_21], %34 {strides = array<i32>} : memref<8x33xf32, #tpu.memory_space<vmem>>, vector<8x33xf32>,
    %c1_i32 = arith.constant 1 : i32
    %36 = arith.cmpi eq, %arg0, %c1_i32 : i32
    %37 = arith.extui %36 : i1 to i32
    %c0_i32_22 = arith.constant 0 : i32
    %38 = arith.cmpi ne, %37, %c0_i32_22 : i32
    scf.if %38 {
      %c0_23 = arith.constant 0 : index
      %c0_24 = arith.constant 0 : index
      %39 = vector.load %arg10[%c0_23, %c0_24] : memref<8x33xf32, #tpu.memory_space<vmem>>, vector<8x33xf32>
      %40 = vector.extract_strided_slice %39 {offsets = [0, 0], sizes = [8, 32], strides = [1, 1]} : vector<8x33xf32> to vector<8x32xf32>
      %41 = vector.extract_strided_slice %39 {offsets = [0, 32], sizes = [8, 1], strides = [1, 1]} : vector<8x33xf32> to vector<8x1xf32>
      %cst_25 = arith.constant 1.000000e+00 : f32
      %42 = vector.broadcast %cst_25 : f32 to vector<8x1xf32>
      %43 = arith.maximumf %41, %42 : vector<8x1xf32>
      %44 = vector.broadcast %43 : vector<8x1xf32> to vector<8x32xf32>
      %45 = arith.divf %40, %44 : vector<8x32xf32>
      %c0_26 = arith.constant 0 : index
      %c0_27 = arith.constant 0 : index
      %46 = vector.load %arg7[%c0_26, %c0_27] : memref<32x128xf32, #tpu.memory_space<vmem>>, vector<32x128xf32>
      %cst_28 = arith.constant dense<0.000000e+00> : vector<8x128xf32>
      %47 = tpu.matmul %45, %46, %cst_28 {dimension_numbers = #tpu.dot_dimension_numbers<[1], [0], [0], [1], [0, 0, 1, 1], [], []>} : vector<8x32xf32>, vector<32x128xf32>, vector<8x128xf32> -> vector<8x128xf32>
      %c0_29 = arith.constant 0 : index
      %c0_30 = arith.constant 0 : index
      %48 = vector.load %arg8[%c0_29, %c0_30] : memref<1x128xf32, #tpu.memory_space<vmem>>, vector<1x128xf32>
      %49 = vector.broadcast %48 : vector<1x128xf32> to vector<8x128xf32>
      %50 = arith.addf %47, %49 : vector<8x128xf32>
      %c0_31 = arith.constant 0 : index
      %c0_32 = arith.constant 0 : index
      %51 = vector.load %arg9[%c0_31, %c0_32] : memref<8x128xf32, #tpu.memory_space<vmem>>, vector<8x128xf32>
      tpu.vector_store %arg9[%c0_31, %c0_32], %50 {strides = array<i32>} : memref<8x128xf32, #tpu.memory_space<vmem>>, vector<8x128xf32>,
    } else {
    }
    return
  }
  func.func @transform_0(%arg0: i32) -> (i32, i32) {
    %c0_i32 = arith.constant 0 : i32
    %c0_i32_0 = arith.constant 0 : i32
    return %arg0, %c0_i32 : i32, i32
  }
  func.func @transform_1(%arg0: i32) -> (i32, i32) {
    %c0_i32 = arith.constant 0 : i32
    %c0_i32_0 = arith.constant 0 : i32
    return %c0_i32, %arg0 : i32, i32
  }
  func.func @transform_2(%arg0: i32) -> (i32, i32) {
    %c0_i32 = arith.constant 0 : i32
    %c0_i32_0 = arith.constant 0 : i32
    %c0_i32_1 = arith.constant 0 : i32
    return %c0_i32, %c0_i32_0 : i32, i32
  }
  func.func @transform_3(%arg0: i32) -> (i32, i32) {
    %c0_i32 = arith.constant 0 : i32
    %c0_i32_0 = arith.constant 0 : i32
    %c0_i32_1 = arith.constant 0 : i32
    return %c0_i32, %c0_i32_0 : i32, i32
  }
  func.func @transform_4(%arg0: i32) -> (i32, i32) {
    %c0_i32 = arith.constant 0 : i32
    %c0_i32_0 = arith.constant 0 : i32
    %c0_i32_1 = arith.constant 0 : i32
    return %c0_i32, %c0_i32_0 : i32, i32
  }
  func.func @transform_5(%arg0: i32) -> (i32, i32) {
    %c0_i32 = arith.constant 0 : i32
    %c0_i32_0 = arith.constant 0 : i32
    %c0_i32_1 = arith.constant 0 : i32
    return %c0_i32, %c0_i32_0 : i32, i32
  }
  func.func @transform_6(%arg0: i32) -> (i32, i32) {
    %c0_i32 = arith.constant 0 : i32
    %c0_i32_0 = arith.constant 0 : i32
    %c0_i32_1 = arith.constant 0 : i32
    return %c0_i32, %c0_i32_0 : i32, i32
  }
  func.func @transform_7(%arg0: i32) -> (i32, i32) {
    %c0_i32 = arith.constant 0 : i32
    %c0_i32_0 = arith.constant 0 : i32
    %c0_i32_1 = arith.constant 0 : i32
    return %c0_i32, %c0_i32_0 : i32, i32
  }
  func.func @transform_8(%arg0: i32) -> (i32, i32) {
    %c0_i32 = arith.constant 0 : i32
    %c0_i32_0 = arith.constant 0 : i32
    %c0_i32_1 = arith.constant 0 : i32
    return %c0_i32, %c0_i32_0 : i32, i32
  }
}

</mosaic_0001>

<llo_original>
// kernel: tpu_custom_call.1
$region0: #{tpu_custom_call.1}
  #allocation0 [shape = 'u32[]', space=smem, size = 0x4, offset = 0x4, fixed_abs, tag = 'smem constant byte address 0x4 - core index']
  #allocation1 [shape = 'u32[72,128]{1,0:T(1,128)}', space=vmem, size = 0x9000, scoped, tag = 'internal scratch']
  #allocation2 [shape = 'f32[8,33]{1,0:T(8,128)}', space=vmem, size = 0x1000, scoped, tag = 'scratch operand']
  %s0 = inlined_call_operand.vmem [shape: f32[512,32], index: 0, kind: input, shape index: {}]
  %s1 = inlined_call_operand.vmem [shape: s32[1,512], index: 1, kind: input, shape index: {}]
  %s2 = inlined_call_operand.vmem [shape: f32[32,32], index: 2, kind: input, shape index: {}]
  %s3 = inlined_call_operand.vmem [shape: f32[1,32], index: 3, kind: input, shape index: {}]
  %s4 = inlined_call_operand.vmem [shape: f32[32,32], index: 4, kind: input, shape index: {}]
  %s5 = inlined_call_operand.vmem [shape: f32[1,32], index: 5, kind: input, shape index: {}]
  %s6 = inlined_call_operand.vmem [shape: f32[32,128], index: 6, kind: input, shape index: {}]
  %s7 = inlined_call_operand.vmem [shape: f32[1,128], index: 7, kind: input, shape index: {}]
  %s8 = inlined_call_operand.hbm [shape: f32[8,128], index: 8, kind: output, shape index: {}]
  %s9 = sld [smem:[#allocation0]]
  $region73: #{tpu_custom_call.1} parent=0
    _
  %s11 = ssub.s32 1, %s9
  %s12 = scalar_select 0, %s11, %s9
  $region1: #{tpu_custom_call.1} parent=0
    #allocation3 [shape = 'u8[4096]{0}', space=vmem, size = 0x1000, scoped, tag = 'output window, operand 0, single buffered']
    #allocation4 [shape = 's32[2]{0}', space=sflag, size = 0x8, scoped, tag = 'scoped memory for tpu_custom_call.1']
    %13 = vsyncpa [#allocation4], 0
    loop: start=0, step=1, limit=4
    $region2: #{tpu_custom_call.1} parent=1 // loop_pre_header
      _
    $region3: #{tpu_custom_call.1} parent=1 // loop_header
      %s15 = sphi 0, %s19
      %p16 = scmp.ge.s32.totalorder %s15, 4
      %s25 = sphi 0, %s27
      %s28 = sphi 0, %s25
      %s29 = sphi 0, %s28
      %s45 = sphi 0, %s29
      %s51 = sphi 0, %s53
      %s54 = sphi 0, %s51
      %s55 = sphi 0, %s54
      %s71 = sphi 0, %s55
      %s75 = sphi 0, %s75
      %s77 = sphi 0, %s75
      %s78 = sphi 0, %s77
      %s92 = sphi 0, %s78
      %s96 = sphi 0, %s96
      %s98 = sphi 0, %s96
      %s99 = sphi 0, %s98
      %s113 = sphi 0, %s99
      %s117 = sphi 0, %s117
      %s119 = sphi 0, %s117
      %s120 = sphi 0, %s119
      %s134 = sphi 0, %s120
      %s138 = sphi 0, %s138
      %s140 = sphi 0, %s138
      %s141 = sphi 0, %s140
      %s155 = sphi 0, %s141
      %s159 = sphi 0, %s159
      %s161 = sphi 0, %s159
      %s162 = sphi 0, %s161
      %s176 = sphi 0, %s162
      %s180 = sphi 0, %s180
      %s182 = sphi 0, %s180
      %s183 = sphi 0, %s182
      %s197 = sphi 0, %s183
      %s201 = sphi 0, %s201
      %s203 = sphi 0, %s201
      %s204 = sphi 0, %s203
      %s218 = sphi 0, %s204
    $region4: #{tpu_custom_call.1} parent=1 // loop_header_branch
      %18 = sbr.rel (%p16) target = $region8
    $region5: #{tpu_custom_call.1} parent=1 // loop_body
      %s20 = ssub.s32 %s15, 1
      %s21 = ssub.s32 %s15, 2
      %s22 = sadd.s32 %s15, 1
      %s23 = ssub.s32 %s15, %s22
      %p24 = scmp.eq.s32.totalorder %s23, 0
      %s26 = sadd.s32 %s25, 1
      %s27 = scalar_select %p24, %s25, %s26
      %p30 = pneg %p24
      %p31 = scmp.eq.s32.totalorder %s15, 1
      %p32 = por %p30, %p31
      %p33 = scmp.ne.s32.totalorder %s25, %s28
      %p34 = scmp.eq.s32.totalorder %s15, 0
      %p35 = por %p33, %p34
      %p36 = scmp.ne.s32.totalorder %s25, %s28
      %p37 = scmp.eq.s32.totalorder %s20, 1
      %p38 = por %p36, %p37
      %p39 = scmp.ne.s32.totalorder %s28, %s29
      %p40 = scmp.eq.s32.totalorder %s20, 0
      %p41 = por %p39, %p40
      %p42 = scmp.ne.s32.totalorder %s28, %s29
      %p43 = scmp.eq.s32.totalorder %s21, 1
      %p44 = por %p42, %p43
      %p46 = scmp.ne.s32.totalorder %s29, %s45
      %p47 = scmp.eq.s32.totalorder %s21, 0
      %p48 = por %p46, %p47
      %s49 = ssub.s32 %s15, %s22
      %p50 = scmp.eq.s32.totalorder %s49, 0
      %s52 = sadd.s32 %s51, 1
      %s53 = scalar_select %p50, %s51, %s52
      %p56 = pneg %p50
      %p57 = scmp.eq.s32.totalorder %s15, 1
      %p58 = por %p56, %p57
      %p59 = scmp.ne.s32.totalorder %s51, %s54
      %p60 = scmp.eq.s32.totalorder %s15, 0
      %p61 = por %p59, %p60
      %p62 = scmp.ne.s32.totalorder %s51, %s54
      %p63 = scmp.eq.s32.totalorder %s20, 1
      %p64 = por %p62, %p63
      %p65 = scmp.ne.s32.totalorder %s54, %s55
      %p66 = scmp.eq.s32.totalorder %s20, 0
      %p67 = por %p65, %p66
      %p68 = scmp.ne.s32.totalorder %s54, %s55
      %p69 = scmp.eq.s32.totalorder %s21, 1
      %p70 = por %p68, %p69
      %p72 = scmp.ne.s32.totalorder %s55, %s71
      %p73 = scmp.eq.s32.totalorder %s21, 0
      %p74 = por %p72, %p73
      %s76 = sadd.s32 %s75, 1
      %p79 = scmp.eq.s32.totalorder %s15, 1
      %p80 = scmp.ne.s32.totalorder %s75, %s77
      %p81 = scmp.eq.s32.totalorder %s15, 0
      %p82 = por %p80, %p81
      %p83 = scmp.ne.s32.totalorder %s75, %s77
      %p84 = scmp.eq.s32.totalorder %s20, 1
      %p85 = por %p83, %p84
      %p86 = scmp.ne.s32.totalorder %s77, %s78
      %p87 = scmp.eq.s32.totalorder %s20, 0
      %p88 = por %p86, %p87
      %p89 = scmp.ne.s32.totalorder %s77, %s78
      %p90 = scmp.eq.s32.totalorder %s21, 1
      %p91 = por %p89, %p90
      %p93 = scmp.ne.s32.totalorder %s78, %s92
      %p94 = scmp.eq.s32.totalorder %s21, 0
      %p95 = por %p93, %p94
      %s97 = sadd.s32 %s96, 1
      %p100 = scmp.eq.s32.totalorder %s15, 1
      %p101 = scmp.ne.s32.totalorder %s96, %s98
      %p102 = scmp.eq.s32.totalorder %s15, 0
      %p103 = por %p101, %p102
      %p104 = scmp.ne.s32.totalorder %s96, %s98
      %p105 = scmp.eq.s32.totalorder %s20, 1
      %p106 = por %p104, %p105
      %p107 = scmp.ne.s32.totalorder %s98, %s99
      %p108 = scmp.eq.s32.totalorder %s20, 0
      %p109 = por %p107, %p108
      %p110 = scmp.ne.s32.totalorder %s98, %s99
      %p111 = scmp.eq.s32.totalorder %s21, 1
      %p112 = por %p110, %p111
      %p114 = scmp.ne.s32.totalorder %s99, %s113
      %p115 = scmp.eq.s32.totalorder %s21, 0
      %p116 = por %p114, %p115
      %s118 = sadd.s32 %s117, 1
      %p121 = scmp.eq.s32.totalorder %s15, 1
      %p122 = scmp.ne.s32.totalorder %s117, %s119
      %p123 = scmp.eq.s32.totalorder %s15, 0
      %p124 = por %p122, %p123
      %p125 = scmp.ne.s32.totalorder %s117, %s119
      %p126 = scmp.eq.s32.totalorder %s20, 1
      %p127 = por %p125, %p126
      %p128 = scmp.ne.s32.totalorder %s119, %s120
      %p129 = scmp.eq.s32.totalorder %s20, 0
      %p130 = por %p128, %p129
      %p131 = scmp.ne.s32.totalorder %s119, %s120
      %p132 = scmp.eq.s32.totalorder %s21, 1
      %p133 = por %p131, %p132
      %p135 = scmp.ne.s32.totalorder %s120, %s134
      %p136 = scmp.eq.s32.totalorder %s21, 0
      %p137 = por %p135, %p136
      %s139 = sadd.s32 %s138, 1
      %p142 = scmp.eq.s32.totalorder %s15, 1
      %p143 = scmp.ne.s32.totalorder %s138, %s140
      %p144 = scmp.eq.s32.totalorder %s15, 0
      %p145 = por %p143, %p144
      %p146 = scmp.ne.s32.totalorder %s138, %s140
      %p147 = scmp.eq.s32.totalorder %s20, 1
      %p148 = por %p146, %p147
      %p149 = scmp.ne.s32.totalorder %s140, %s141
      %p150 = scmp.eq.s32.totalorder %s20, 0
      %p151 = por %p149, %p150
      %p152 = scmp.ne.s32.totalorder %s140, %s141
      %p153 = scmp.eq.s32.totalorder %s21, 1
      %p154 = por %p152, %p153
      %p156 = scmp.ne.s32.totalorder %s141, %s155
      %p157 = scmp.eq.s32.totalorder %s21, 0
      %p158 = por %p156, %p157
      %s160 = sadd.s32 %s159, 1
      %p163 = scmp.eq.s32.totalorder %s15, 1
      %p164 = scmp.ne.s32.totalorder %s159, %s161
      %p165 = scmp.eq.s32.totalorder %s15, 0
      %p166 = por %p164, %p165
      %p167 = scmp.ne.s32.totalorder %s159, %s161
      %p168 = scmp.eq.s32.totalorder %s20, 1
      %p169 = por %p167, %p168
      %p170 = scmp.ne.s32.totalorder %s161, %s162
      %p171 = scmp.eq.s32.totalorder %s20, 0
      %p172 = por %p170, %p171
      %p173 = scmp.ne.s32.totalorder %s161, %s162
      %p174 = scmp.eq.s32.totalorder %s21, 1
      %p175 = por %p173, %p174
      %p177 = scmp.ne.s32.totalorder %s162, %s176
      %p178 = scmp.eq.s32.totalorder %s21, 0
      %p179 = por %p177, %p178
      %s181 = sadd.s32 %s180, 1
      %p184 = scmp.eq.s32.totalorder %s15, 1
      %p185 = scmp.ne.s32.totalorder %s180, %s182
      %p186 = scmp.eq.s32.totalorder %s15, 0
      %p187 = por %p185, %p186
      %p188 = scmp.ne.s32.totalorder %s180, %s182
      %p189 = scmp.eq.s32.totalorder %s20, 1
      %p190 = por %p188, %p189
      %p191 = scmp.ne.s32.totalorder %s182, %s183
      %p192 = scmp.eq.s32.totalorder %s20, 0
      %p193 = por %p191, %p192
      %p194 = scmp.ne.s32.totalorder %s182, %s183
      %p195 = scmp.eq.s32.totalorder %s21, 1
      %p196 = por %p194, %p195
      %p198 = scmp.ne.s32.totalorder %s183, %s197
      %p199 = scmp.eq.s32.totalorder %s21, 0
      %p200 = por %p198, %p199
      %s202 = sadd.s32 %s201, 1
      %p205 = scmp.eq.s32.totalorder %s15, 1
      %p206 = scmp.ne.s32.totalorder %s201, %s203
      %p207 = scmp.eq.s32.totalorder %s15, 0
      %p208 = por %p206, %p207
      %p209 = scmp.ne.s32.totalorder %s201, %s203
      %p210 = scmp.eq.s32.totalorder %s20, 1
      %p211 = por %p209, %p210
      %p212 = scmp.ne.s32.totalorder %s203, %s204
      %p213 = scmp.eq.s32.totalorder %s20, 0
      %p214 = por %p212, %p213
      %p215 = scmp.ne.s32.totalorder %s203, %s204
      %p216 = scmp.eq.s32.totalorder %s21, 1
      %p217 = por %p215, %p216
      %p219 = scmp.ne.s32.totalorder %s204, %s218
      %p220 = scmp.eq.s32.totalorder %s21, 0
      %p221 = por %p219, %p220
      %p222 = scmp.le.s32.totalorder 1, %s15
      %p223 = scmp.lt.s32.totalorder %s15, 3
      %p224 = pnand %p222, %p223
      %p225 = pneg %p224
      // Predicated region
      $region9: #{tpu_custom_call.1} parent=5 // pred_check
        _
      $region10: #{tpu_custom_call.1} parent=5 // pred_check_branch
        %227 = sbr.rel (%p224) target = $region12
      $region11: #{tpu_custom_call.1} parent=5 // pred_region
        %s228 = ssub.s32 %s15, 1
        // Predicated region
        $region13: #{tpu_custom_call.1} parent=11 // pred_check
          %p229 = pneg %p88
        $region14: #{tpu_custom_call.1} parent=11 // pred_check_branch
          %231 = sbr.rel (%p229) target = $region16
        $region15: #{tpu_custom_call.1} parent=11 // pred_region
          _
        $region16: #{tpu_custom_call.1} parent=11 // pred_fallthru
          _
        // Predicated region
        $region17: #{tpu_custom_call.1} parent=11 // pred_check
          %p232 = pneg %p109
        $region18: #{tpu_custom_call.1} parent=11 // pred_check_branch
          %234 = sbr.rel (%p232) target = $region20
        $region19: #{tpu_custom_call.1} parent=11 // pred_region
          _
        $region20: #{tpu_custom_call.1} parent=11 // pred_fallthru
          _
        // Predicated region
        $region21: #{tpu_custom_call.1} parent=11 // pred_check
          %p235 = pneg %p130
        $region22: #{tpu_custom_call.1} parent=11 // pred_check_branch
          %237 = sbr.rel (%p235) target = $region24
        $region23: #{tpu_custom_call.1} parent=11 // pred_region
          _
        $region24: #{tpu_custom_call.1} parent=11 // pred_fallthru
          _
        // Predicated region
        $region25: #{tpu_custom_call.1} parent=11 // pred_check
          %p238 = pneg %p151
        $region26: #{tpu_custom_call.1} parent=11 // pred_check_branch
          %240 = sbr.rel (%p238) target = $region28
        $region27: #{tpu_custom_call.1} parent=11 // pred_region
          _
        $region28: #{tpu_custom_call.1} parent=11 // pred_fallthru
          _
        // Predicated region
        $region29: #{tpu_custom_call.1} parent=11 // pred_check
          %p241 = pneg %p172
        $region30: #{tpu_custom_call.1} parent=11 // pred_check_branch
          %243 = sbr.rel (%p241) target = $region32
        $region31: #{tpu_custom_call.1} parent=11 // pred_region
          _
        $region32: #{tpu_custom_call.1} parent=11 // pred_fallthru
          _
        // Predicated region
        $region33: #{tpu_custom_call.1} parent=11 // pred_check
          %p244 = pneg %p193
        $region34: #{tpu_custom_call.1} parent=11 // pred_check_branch
          %246 = sbr.rel (%p244) target = $region36
        $region35: #{tpu_custom_call.1} parent=11 // pred_region
          _
        $region36: #{tpu_custom_call.1} parent=11 // pred_fallthru
          _
      $region12: #{tpu_custom_call.1} parent=5 // pred_fallthru
        _
      %p247 = scmp.lt.s32.totalorder %s15, 2
      // Predicated region
      $region37: #{tpu_custom_call.1} parent=5 // pred_check
        %p248 = pneg %p247
      $region38: #{tpu_custom_call.1} parent=5 // pred_check_branch
        %250 = sbr.rel (%p248) target = $region40
      $region39: #{tpu_custom_call.1} parent=5 // pred_region
        // Predicated region
        $region41: #{tpu_custom_call.1} parent=39 // pred_check
          %p251 = pneg %p35
        $region42: #{tpu_custom_call.1} parent=39 // pred_check_branch
          %253 = sbr.rel (%p251) target = $region44
        $region43: #{tpu_custom_call.1} parent=39 // pred_region
          %s254 = smul.u32 32, %s15
          %p255 = scmp.lt.s32.totalorder %s254, 63
          %s256 = scalar_select %p255, %s254, 63
          %s257 = smul.addr %s256, 8
          %s258 = scalar_lea.vmem %s0, %s257
          %s259 = smul.u32 32, %s15
        $region44: #{tpu_custom_call.1} parent=39 // pred_fallthru
          _
        // Predicated region
        $region45: #{tpu_custom_call.1} parent=39 // pred_check
          %p260 = pneg %p61
        $region46: #{tpu_custom_call.1} parent=39 // pred_check_branch
          %262 = sbr.rel (%p260) target = $region48
        $region47: #{tpu_custom_call.1} parent=39 // pred_region
          %s263 = smul.u32 2, %s15
          %p264 = scmp.lt.s32.totalorder %s263, 3
          %s265 = scalar_select %p264, %s263, 3
          %s266 = scalar_lea.vmem %s1, %s265
          %s267 = smul.u32 2, %s15
        $region48: #{tpu_custom_call.1} parent=39 // pred_fallthru
          _
      $region40: #{tpu_custom_call.1} parent=5 // pred_fallthru
        _
      %p268 = scmp.le.s32.totalorder 1, %s15
      %p269 = scmp.lt.s32.totalorder %s15, 3
      %p270 = pnand %p268, %p269
      %p271 = pneg %p270
      // Predicated region
      $region49: #{tpu_custom_call.1} parent=5 // pred_check
        _
      $region50: #{tpu_custom_call.1} parent=5 // pred_check_branch
        %273 = sbr.rel (%p270) target = $region52
      $region51: #{tpu_custom_call.1} parent=5 // pred_region
        %s274 = ssub.s32 %s15, 1
        %s275 = smul.u32 32, %s20
        %p276 = scmp.lt.s32.totalorder %s275, 63
        %s277 = scalar_select %p276, %s275, 63
        %s278 = smul.addr %s277, 8
        %s279 = scalar_lea.vmem %s0, %s278
        %p280 = pneg %p41
        %p281 = pneg %p38
        %s282 = smul.u32 2, %s20
        %p283 = scmp.lt.s32.totalorder %s282, 3
        %s284 = scalar_select %p283, %s282, 3
        %s285 = scalar_lea.vmem %s1, %s284
        %p286 = pneg %p67
        %p287 = pneg %p64
        %p288 = pneg %p88
        %p289 = pneg %p85
        %p290 = pneg %p109
        %p291 = pneg %p106
        %p292 = pneg %p130
        %p293 = pneg %p127
        %p294 = pneg %p151
        %p295 = pneg %p148
        %p296 = pneg %p172
        %p297 = pneg %p169
        %p298 = pneg %p193
        %p299 = pneg %p190
        %p300 = pneg %p214
        %p301 = pneg %p211
        %s302 = smul.u32 32, %s20
        %p303 = scmp.lt.s32.totalorder %s302, 63
        %s304 = scalar_select %p303, %s302, 63
        %s305 = smul.addr %s304, 8
        %s306 = scalar_lea.vmem %s0, %s305
        %s307 = smul.u32 32, %s20
        %s308 = smul.u32 2, %s20
        %p309 = scmp.lt.s32.totalorder %s308, 3
        %s310 = scalar_select %p309, %s308, 3
        %s311 = scalar_lea.vmem %s1, %s310
        %s312 = smul.u32 2, %s20
        %p313 = scmp.eq.s32.totalorder %s20, 0
        // Predicated region
        $region53: #{tpu_custom_call.1} parent=51 // pred_check
          %p314 = pneg %p313
        $region54: #{tpu_custom_call.1} parent=51 // pred_check_branch
          %316 = sbr.rel (%p314) target = $region56
        $region55: #{tpu_custom_call.1} parent=51 // pred_region
          %vm317 = vcmask 269312
          %318 = vst.msk [vmem:[#allocation2] sm:$0xff] %vm317, 0.0
        $region56: #{tpu_custom_call.1} parent=51 // pred_fallthru
          _
        %v319 = vld [vmem:[%s306] sm:$0xff]
        %v320 = vld [vmem:[%s306 + $0x8] sm:$0xff]
        %v321 = vld [vmem:[%s306 + $0x10] sm:$0xff]
        %v322 = vld [vmem:[%s306 + $0x18] sm:$0xff]
        %v323 = vld [vmem:[%s306 + $0x20] sm:$0xff]
        %v324 = vld [vmem:[%s306 + $0x28] sm:$0xff]
        %v325 = vld [vmem:[%s306 + $0x30] sm:$0xff]
        %v326 = vld [vmem:[%s306 + $0x38] sm:$0xff]
        %v327 = vld [vmem:[%s306 + $0x40] sm:$0xff]
        %v328 = vld [vmem:[%s306 + $0x48] sm:$0xff]
        %v329 = vld [vmem:[%s306 + $0x50] sm:$0xff]
        %v330 = vld [vmem:[%s306 + $0x58] sm:$0xff]
        %v331 = vld [vmem:[%s306 + $0x60] sm:$0xff]
        %v332 = vld [vmem:[%s306 + $0x68] sm:$0xff]
        %v333 = vld [vmem:[%s306 + $0x70] sm:$0xff]
        %v334 = vld [vmem:[%s306 + $0x78] sm:$0xff]
        %v335 = vld [vmem:[%s306 + $0x80] sm:$0xff]
        %v336 = vld [vmem:[%s306 + $0x88] sm:$0xff]
        %v337 = vld [vmem:[%s306 + $0x90] sm:$0xff]
        %v338 = vld [vmem:[%s306 + $0x98] sm:$0xff]
        %v339 = vld [vmem:[%s306 + $0xa0] sm:$0xff]
        %v340 = vld [vmem:[%s306 + $0xa8] sm:$0xff]
        %v341 = vld [vmem:[%s306 + $0xb0] sm:$0xff]
        %v342 = vld [vmem:[%s306 + $0xb8] sm:$0xff]
        %v343 = vld [vmem:[%s306 + $0xc0] sm:$0xff]
        %v344 = vld [vmem:[%s306 + $0xc8] sm:$0xff]
        %v345 = vld [vmem:[%s306 + $0xd0] sm:$0xff]
        %v346 = vld [vmem:[%s306 + $0xd8] sm:$0xff]
        %v347 = vld [vmem:[%s306 + $0xe0] sm:$0xff]
        %v348 = vld [vmem:[%s306 + $0xe8] sm:$0xff]
        %v349 = vld [vmem:[%s306 + $0xf0] sm:$0xff]
        %v350 = vld [vmem:[%s306 + $0xf8] sm:$0xff]
        %v351 = vld [vmem:[%s2] sm:$0xff]
        %v352 = vld [vmem:[%s2 + $0x8] sm:$0xff]
        %v353 = vld [vmem:[%s2 + $0x10] sm:$0xff]
        %v354 = vld [vmem:[%s2 + $0x18] sm:$0xff]
        %v355 = vld [vmem:[%s3] sm:$0x1]
        %v357 = vperm.slane %v355, 0
        %vm359 = vcmask 261120
        %v361 = vsel %vm359, %v319, 0
        %v364 = vsel %vm359, %v320, 0
        %v367 = vsel %vm359, %v321, 0
        %v370 = vsel %vm359, %v322, 0
        %v373 = vsel %vm359, %v323, 0
        %v376 = vsel %vm359, %v324, 0
        %v379 = vsel %vm359, %v325, 0
        %v382 = vsel %vm359, %v326, 0
        %v385 = vsel %vm359, %v327, 0
        %v388 = vsel %vm359, %v328, 0
        %v391 = vsel %vm359, %v329, 0
        %v394 = vsel %vm359, %v330, 0
        %v397 = vsel %vm359, %v331, 0
        %v400 = vsel %vm359, %v332, 0
        %v403 = vsel %vm359, %v333, 0
        %v406 = vsel %vm359, %v334, 0
        %v409 = vsel %vm359, %v335, 0
        %v412 = vsel %vm359, %v336, 0
        %v415 = vsel %vm359, %v337, 0
        %v418 = vsel %vm359, %v338, 0
        %v421 = vsel %vm359, %v339, 0
        %v424 = vsel %vm359, %v340, 0
        %v427 = vsel %vm359, %v341, 0
        %v430 = vsel %vm359, %v342, 0
        %v433 = vsel %vm359, %v343, 0
        %v436 = vsel %vm359, %v344, 0
        %v439 = vsel %vm359, %v345, 0
        %v442 = vsel %vm359, %v346, 0
        %v445 = vsel %vm359, %v347, 0
        %v448 = vsel %vm359, %v348, 0
        %v451 = vsel %vm359, %v349, 0
        %v454 = vsel %vm359, %v350, 0
        %456 = vmatpush.msra.mxu0 0.0
        %457 = vmatpush.msra.mxu0 0.0
        %458 = vmatpush.msra.mxu0 0.0
        %459 = vmatpush.msra.mxu0 0.0
        %460 = vmatpush.msra.mxu0 0.0
        %461 = vmatpush.msra.mxu0 0.0
        %462 = vmatpush.msra.mxu0 0.0
        %463 = vmatpush.msra.mxu0 0.0
        %464 = vmatpush.msra.mxu0 0.0
        %465 = vmatpush.msra.mxu0 0.0
        %466 = vmatpush.msra.mxu0 0.0
        %467 = vmatpush.msra.mxu0 0.0
        %468 = vmatpush.msra.mxu0 %v354
        %469 = vmatpush.msra.mxu0 %v353
        %470 = vmatpush.msra.mxu0 %v352
        %471 = vmatpush.msra.mxu0 %v351
        %472 = vmatmul.f32.gmra.mxu0 %v361
        %v473 = vpop.f32.mrf.mxu0
        %v474 = vadd.f32 %v357, %v473
        %475 = vmatmul.f32.gmra.mxu0 %v364
        %v476 = vpop.f32.mrf.mxu0
        %v477 = vadd.f32 %v357, %v476
        %478 = vmatmul.f32.gmra.mxu0 %v367
        %v479 = vpop.f32.mrf.mxu0
        %v480 = vadd.f32 %v357, %v479
        %481 = vmatmul.f32.gmra.mxu0 %v370
        %v482 = vpop.f32.mrf.mxu0
        %v483 = vadd.f32 %v357, %v482
        %484 = vmatmul.f32.gmra.mxu0 %v373
        %v485 = vpop.f32.mrf.mxu0
        %v486 = vadd.f32 %v357, %v485
        %487 = vmatmul.f32.gmra.mxu0 %v376
        %v488 = vpop.f32.mrf.mxu0
        %v489 = vadd.f32 %v357, %v488
        %490 = vmatmul.f32.gmra.mxu0 %v379
        %v491 = vpop.f32.mrf.mxu0
        %v492 = vadd.f32 %v357, %v491
        %493 = vmatmul.f32.gmra.mxu0 %v382
        %v494 = vpop.f32.mrf.mxu0
        %v495 = vadd.f32 %v357, %v494
        %496 = vmatmul.f32.gmra.mxu0 %v385
        %v497 = vpop.f32.mrf.mxu0
        %v498 = vadd.f32 %v357, %v497
        %499 = vmatmul.f32.gmra.mxu0 %v388
        %v500 = vpop.f32.mrf.mxu0
        %v501 = vadd.f32 %v357, %v500
        %502 = vmatmul.f32.gmra.mxu0 %v391
        %v503 = vpop.f32.mrf.mxu0
        %v504 = vadd.f32 %v357, %v503
        %505 = vmatmul.f32.gmra.mxu0 %v394
        %v506 = vpop.f32.mrf.mxu0
        %v507 = vadd.f32 %v357, %v506
        %508 = vmatmul.f32.gmra.mxu0 %v397
        %v509 = vpop.f32.mrf.mxu0
        %v510 = vadd.f32 %v357, %v509
        %511 = vmatmul.f32.gmra.mxu0 %v400
        %v512 = vpop.f32.mrf.mxu0
        %v513 = vadd.f32 %v357, %v512
        %514 = vmatmul.f32.gmra.mxu0 %v403
        %v515 = vpop.f32.mrf.mxu0
        %v516 = vadd.f32 %v357, %v515
        %517 = vmatmul.f32.gmra.mxu0 %v406
        %v518 = vpop.f32.mrf.mxu0
        %v519 = vadd.f32 %v357, %v518
        %520 = vmatmul.f32.gmra.mxu0 %v409
        %v521 = vpop.f32.mrf.mxu0
        %v522 = vadd.f32 %v357, %v521
        %523 = vmatmul.f32.gmra.mxu0 %v412
        %v524 = vpop.f32.mrf.mxu0
        %v525 = vadd.f32 %v357, %v524
        %526 = vmatmul.f32.gmra.mxu0 %v415
        %v527 = vpop.f32.mrf.mxu0
        %v528 = vadd.f32 %v357, %v527
        %529 = vmatmul.f32.gmra.mxu0 %v418
        %v530 = vpop.f32.mrf.mxu0
        %v531 = vadd.f32 %v357, %v530
        %532 = vmatmul.f32.gmra.mxu0 %v421
        %v533 = vpop.f32.mrf.mxu0
        %v534 = vadd.f32 %v357, %v533
        %535 = vmatmul.f32.gmra.mxu0 %v424
        %v536 = vpop.f32.mrf.mxu0
        %v537 = vadd.f32 %v357, %v536
        %538 = vmatmul.f32.gmra.mxu0 %v427
        %v539 = vpop.f32.mrf.mxu0
        %v540 = vadd.f32 %v357, %v539
        %541 = vmatmul.f32.gmra.mxu0 %v430
        %v542 = vpop.f32.mrf.mxu0
        %v543 = vadd.f32 %v357, %v542
        %544 = vmatmul.f32.gmra.mxu0 %v433
        %v545 = vpop.f32.mrf.mxu0
        %v546 = vadd.f32 %v357, %v545
        %547 = vmatmul.f32.gmra.mxu0 %v436
        %v548 = vpop.f32.mrf.mxu0
        %v549 = vadd.f32 %v357, %v548
        %550 = vmatmul.f32.gmra.mxu0 %v439
        %v551 = vpop.f32.mrf.mxu0
        %v552 = vadd.f32 %v357, %v551
        %553 = vmatmul.f32.gmra.mxu0 %v442
        %v554 = vpop.f32.mrf.mxu0
        %v555 = vadd.f32 %v357, %v554
        %556 = vmatmul.f32.gmra.mxu0 %v445
        %v557 = vpop.f32.mrf.mxu0
        %v558 = vadd.f32 %v357, %v557
        %559 = vmatmul.f32.gmra.mxu0 %v448
        %v560 = vpop.f32.mrf.mxu0
        %v561 = vadd.f32 %v357, %v560
        %562 = vmatmul.f32.gmra.mxu0 %v451
        %v563 = vpop.f32.mrf.mxu0
        %v564 = vadd.f32 %v357, %v563
        %565 = vmatmul.f32.gmra.mxu0 %v454
        %v566 = vpop.f32.mrf.mxu0
        %v567 = vadd.f32 %v357, %v566
        %568 = vdwg.mxu0
        %v569 = vmax.f32 %v474, 0.0
        %v570 = vmax.f32 %v477, 0.0
        %v571 = vmax.f32 %v480, 0.0
        %v572 = vmax.f32 %v483, 0.0
        %v573 = vmax.f32 %v486, 0.0
        %v574 = vmax.f32 %v489, 0.0
        %v575 = vmax.f32 %v492, 0.0
        %v576 = vmax.f32 %v495, 0.0
        %v577 = vmax.f32 %v498, 0.0
        %v578 = vmax.f32 %v501, 0.0
        %v579 = vmax.f32 %v504, 0.0
        %v580 = vmax.f32 %v507, 0.0
        %v581 = vmax.f32 %v510, 0.0
        %v582 = vmax.f32 %v513, 0.0
        %v583 = vmax.f32 %v516, 0.0
        %v584 = vmax.f32 %v519, 0.0
        %v585 = vmax.f32 %v522, 0.0
        %v586 = vmax.f32 %v525, 0.0
        %v587 = vmax.f32 %v528, 0.0
        %v588 = vmax.f32 %v531, 0.0
        %v589 = vmax.f32 %v534, 0.0
        %v590 = vmax.f32 %v537, 0.0
        %v591 = vmax.f32 %v540, 0.0
        %v592 = vmax.f32 %v543, 0.0
        %v593 = vmax.f32 %v546, 0.0
        %v594 = vmax.f32 %v549, 0.0
        %v595 = vmax.f32 %v552, 0.0
        %v596 = vmax.f32 %v555, 0.0
        %v597 = vmax.f32 %v558, 0.0
        %v598 = vmax.f32 %v561, 0.0
        %v599 = vmax.f32 %v564, 0.0
        %v600 = vmax.f32 %v567, 0.0
        %v601 = vand.u32 2147483647, %v474
        %v602 = vand.u32 2147483647, %v477
        %v603 = vand.u32 2147483647, %v480
        %v604 = vand.u32 2147483647, %v483
        %v605 = vand.u32 2147483647, %v486
        %v606 = vand.u32 2147483647, %v489
        %v607 = vand.u32 2147483647, %v492
        %v608 = vand.u32 2147483647, %v495
        %v609 = vand.u32 2147483647, %v498
        %v610 = vand.u32 2147483647, %v501
        %v611 = vand.u32 2147483647, %v504
        %v612 = vand.u32 2147483647, %v507
        %v613 = vand.u32 2147483647, %v510
        %v614 = vand.u32 2147483647, %v513
        %v615 = vand.u32 2147483647, %v516
        %v616 = vand.u32 2147483647, %v519
        %v617 = vand.u32 2147483647, %v522
        %v618 = vand.u32 2147483647, %v525
        %v619 = vand.u32 2147483647, %v528
        %v620 = vand.u32 2147483647, %v531
        %v621 = vand.u32 2147483647, %v534
        %v622 = vand.u32 2147483647, %v537
        %v623 = vand.u32 2147483647, %v540
        %v624 = vand.u32 2147483647, %v543
        %v625 = vand.u32 2147483647, %v546
        %v626 = vand.u32 2147483647, %v549
        %v627 = vand.u32 2147483647, %v552
        %v628 = vand.u32 2147483647, %v555
        %v629 = vand.u32 2147483647, %v558
        %v630 = vand.u32 2147483647, %v561
        %v631 = vand.u32 2147483647, %v564
        %v632 = vand.u32 2147483647, %v567
        %v633 = vsub.f32 0.0, %v601
        %v634 = vsub.f32 0.0, %v602
        %v635 = vsub.f32 0.0, %v603
        %v636 = vsub.f32 0.0, %v604
        %v637 = vsub.f32 0.0, %v605
        %v638 = vsub.f32 0.0, %v606
        %v639 = vsub.f32 0.0, %v607
        %v640 = vsub.f32 0.0, %v608
        %v641 = vsub.f32 0.0, %v609
        %v642 = vsub.f32 0.0, %v610
        %v643 = vsub.f32 0.0, %v611
        %v644 = vsub.f32 0.0, %v612
        %v645 = vsub.f32 0.0, %v613
        %v646 = vsub.f32 0.0, %v614
        %v647 = vsub.f32 0.0, %v615
        %v648 = vsub.f32 0.0, %v616
        %v649 = vsub.f32 0.0, %v617
        %v650 = vsub.f32 0.0, %v618
        %v651 = vsub.f32 0.0, %v619
        %v652 = vsub.f32 0.0, %v620
        %v653 = vsub.f32 0.0, %v621
        %v654 = vsub.f32 0.0, %v622
        %v655 = vsub.f32 0.0, %v623
        %v656 = vsub.f32 0.0, %v624
        %v657 = vsub.f32 0.0, %v625
        %v658 = vsub.f32 0.0, %v626
        %v659 = vsub.f32 0.0, %v627
        %v660 = vsub.f32 0.0, %v628
        %v661 = vsub.f32 0.0, %v629
        %v662 = vsub.f32 0.0, %v630
        %v663 = vsub.f32 0.0, %v631
        %v664 = vsub.f32 0.0, %v632
        %v665 = vmul.f32 %v633, 1.442695
        %v666 = vpow.pop %v665
        %v667 = vmul.f32 %v634, 1.442695
        %v668 = vpow.pop %v667
        %v669 = vmul.f32 %v635, 1.442695
        %v670 = vpow.pop %v669
        %v671 = vmul.f32 %v636, 1.442695
        %v672 = vpow.pop %v671
        %v673 = vmul.f32 %v637, 1.442695
        %v674 = vpow.pop %v673
        %v675 = vmul.f32 %v638, 1.442695
        %v676 = vpow.pop %v675
        %v677 = vmul.f32 %v639, 1.442695
        %v678 = vpow.pop %v677
        %v679 = vmul.f32 %v640, 1.442695
        %v680 = vpow.pop %v679
        %v681 = vmul.f32 %v641, 1.442695
        %v682 = vpow.pop %v681
        %v683 = vmul.f32 %v642, 1.442695
        %v684 = vpow.pop %v683
        %v685 = vmul.f32 %v643, 1.442695
        %v686 = vpow.pop %v685
        %v687 = vmul.f32 %v644, 1.442695
        %v688 = vpow.pop %v687
        %v689 = vmul.f32 %v645, 1.442695
        %v690 = vpow.pop %v689
        %v691 = vmul.f32 %v646, 1.442695
        %v692 = vpow.pop %v691
        %v693 = vmul.f32 %v647, 1.442695
        %v694 = vpow.pop %v693
        %v695 = vmul.f32 %v648, 1.442695
        %v696 = vpow.pop %v695
        %v697 = vmul.f32 %v649, 1.442695
        %v698 = vpow.pop %v697
        %v699 = vmul.f32 %v650, 1.442695
        %v700 = vpow.pop %v699
        %v701 = vmul.f32 %v651, 1.442695
        %v702 = vpow.pop %v701
        %v703 = vmul.f32 %v652, 1.442695
        %v704 = vpow.pop %v703
        %v705 = vmul.f32 %v653, 1.442695
        %v706 = vpow.pop %v705
        %v707 = vmul.f32 %v654, 1.442695
        %v708 = vpow.pop %v707
        %v709 = vmul.f32 %v655, 1.442695
        %v710 = vpow.pop %v709
        %v711 = vmul.f32 %v656, 1.442695
        %v712 = vpow.pop %v711
        %v713 = vmul.f32 %v657, 1.442695
        %v714 = vpow.pop %v713
        %v715 = vmul.f32 %v658, 1.442695
        %v716 = vpow.pop %v715
        %v717 = vmul.f32 %v659, 1.442695
        %v718 = vpow.pop %v717
        %v719 = vmul.f32 %v660, 1.442695
        %v720 = vpow.pop %v719
        %v721 = vmul.f32 %v661, 1.442695
        %v722 = vpow.pop %v721
        %v723 = vmul.f32 %v662, 1.442695
        %v724 = vpow.pop %v723
        %v725 = vmul.f32 %v663, 1.442695
        %v726 = vpow.pop %v725
        %v727 = vmul.f32 %v664, 1.442695
        %v728 = vpow.pop %v727
        %v729 = vadd.f32 %v666, 1.0
        %v730 = vlog2.pop %v729
        %v731 = vmul.f32 %v730, 0.6931472
        %v732 = vmul.f32 -0.5, %v666
        %v733 = vadd.f32 %v732, 1.0
        %v734 = vmul.f32 %v733, %v666
        %v735 = vand.u32 2147483647, %v666
        %vm736 = vcmp.lt.f32.partialorder %v735, 0.0004427343
        %v737 = vsel %vm736, %v734, %v731
        %v738 = vadd.f32 %v668, 1.0
        %v739 = vlog2.pop %v738
        %v740 = vmul.f32 %v739, 0.6931472
        %v741 = vmul.f32 -0.5, %v668
        %v742 = vadd.f32 %v741, 1.0
        %v743 = vmul.f32 %v742, %v668
        %v744 = vand.u32 2147483647, %v668
        %vm745 = vcmp.lt.f32.partialorder %v744, 0.0004427343
        %v746 = vsel %vm745, %v743, %v740
        %v747 = vadd.f32 %v670, 1.0
        %v748 = vlog2.pop %v747
        %v749 = vmul.f32 %v748, 0.6931472
        %v750 = vmul.f32 -0.5, %v670
        %v751 = vadd.f32 %v750, 1.0
        %v752 = vmul.f32 %v751, %v670
        %v753 = vand.u32 2147483647, %v670
        %vm754 = vcmp.lt.f32.partialorder %v753, 0.0004427343
        %v755 = vsel %vm754, %v752, %v749
        %v756 = vadd.f32 %v672, 1.0
        %v757 = vlog2.pop %v756
        %v758 = vmul.f32 %v757, 0.6931472
        %v759 = vmul.f32 -0.5, %v672
        %v760 = vadd.f32 %v759, 1.0
        %v761 = vmul.f32 %v760, %v672
        %v762 = vand.u32 2147483647, %v672
        %vm763 = vcmp.lt.f32.partialorder %v762, 0.0004427343
        %v764 = vsel %vm763, %v761, %v758
        %v765 = vadd.f32 %v674, 1.0
        %v766 = vlog2.pop %v765
        %v767 = vmul.f32 %v766, 0.6931472
        %v768 = vmul.f32 -0.5, %v674
        %v769 = vadd.f32 %v768, 1.0
        %v770 = vmul.f32 %v769, %v674
        %v771 = vand.u32 2147483647, %v674
        %vm772 = vcmp.lt.f32.partialorder %v771, 0.0004427343
        %v773 = vsel %vm772, %v770, %v767
        %v774 = vadd.f32 %v676, 1.0
        %v775 = vlog2.pop %v774
        %v776 = vmul.f32 %v775, 0.6931472
        %v777 = vmul.f32 -0.5, %v676
        %v778 = vadd.f32 %v777, 1.0
        %v779 = vmul.f32 %v778, %v676
        %v780 = vand.u32 2147483647, %v676
        %vm781 = vcmp.lt.f32.partialorder %v780, 0.0004427343
        %v782 = vsel %vm781, %v779, %v776
        %v783 = vadd.f32 %v678, 1.0
        %v784 = vlog2.pop %v783
        %v785 = vmul.f32 %v784, 0.6931472
        %v786 = vmul.f32 -0.5, %v678
        %v787 = vadd.f32 %v786, 1.0
        %v788 = vmul.f32 %v787, %v678
        %v789 = vand.u32 2147483647, %v678
        %vm790 = vcmp.lt.f32.partialorder %v789, 0.0004427343
        %v791 = vsel %vm790, %v788, %v785
        %v792 = vadd.f32 %v680, 1.0
        %v793 = vlog2.pop %v792
        %v794 = vmul.f32 %v793, 0.6931472
        %v795 = vmul.f32 -0.5, %v680
        %v796 = vadd.f32 %v795, 1.0
        %v797 = vmul.f32 %v796, %v680
        %v798 = vand.u32 2147483647, %v680
        %vm799 = vcmp.lt.f32.partialorder %v798, 0.0004427343
        %v800 = vsel %vm799, %v797, %v794
        %v801 = vadd.f32 %v682, 1.0
        %v802 = vlog2.pop %v801
        %v803 = vmul.f32 %v802, 0.6931472
        %v804 = vmul.f32 -0.5, %v682
        %v805 = vadd.f32 %v804, 1.0
        %v806 = vmul.f32 %v805, %v682
        %v807 = vand.u32 2147483647, %v682
        %vm808 = vcmp.lt.f32.partialorder %v807, 0.0004427343
        %v809 = vsel %vm808, %v806, %v803
        %v810 = vadd.f32 %v684, 1.0
        %v811 = vlog2.pop %v810
        %v812 = vmul.f32 %v811, 0.6931472
        %v813 = vmul.f32 -0.5, %v684
        %v814 = vadd.f32 %v813, 1.0
        %v815 = vmul.f32 %v814, %v684
        %v816 = vand.u32 2147483647, %v684
        %vm817 = vcmp.lt.f32.partialorder %v816, 0.0004427343
        %v818 = vsel %vm817, %v815, %v812
        %v819 = vadd.f32 %v686, 1.0
        %v820 = vlog2.pop %v819
        %v821 = vmul.f32 %v820, 0.6931472
        %v822 = vmul.f32 -0.5, %v686
        %v823 = vadd.f32 %v822, 1.0
        %v824 = vmul.f32 %v823, %v686
        %v825 = vand.u32 2147483647, %v686
        %vm826 = vcmp.lt.f32.partialorder %v825, 0.0004427343
        %v827 = vsel %vm826, %v824, %v821
        %v828 = vadd.f32 %v688, 1.0
        %v829 = vlog2.pop %v828
        %v830 = vmul.f32 %v829, 0.6931472
        %v831 = vmul.f32 -0.5, %v688
        %v832 = vadd.f32 %v831, 1.0
        %v833 = vmul.f32 %v832, %v688
        %v834 = vand.u32 2147483647, %v688
        %vm835 = vcmp.lt.f32.partialorder %v834, 0.0004427343
        %v836 = vsel %vm835, %v833, %v830
        %v837 = vadd.f32 %v690, 1.0
        %v838 = vlog2.pop %v837
        %v839 = vmul.f32 %v838, 0.6931472
        %v840 = vmul.f32 -0.5, %v690
        %v841 = vadd.f32 %v840, 1.0
        %v842 = vmul.f32 %v841, %v690
        %v843 = vand.u32 2147483647, %v690
        %vm844 = vcmp.lt.f32.partialorder %v843, 0.0004427343
        %v845 = vsel %vm844, %v842, %v839
        %v846 = vadd.f32 %v692, 1.0
        %v847 = vlog2.pop %v846
        %v848 = vmul.f32 %v847, 0.6931472
        %v849 = vmul.f32 -0.5, %v692
        %v850 = vadd.f32 %v849, 1.0
        %v851 = vmul.f32 %v850, %v692
        %v852 = vand.u32 2147483647, %v692
        %vm853 = vcmp.lt.f32.partialorder %v852, 0.0004427343
        %v854 = vsel %vm853, %v851, %v848
        %v855 = vadd.f32 %v694, 1.0
        %v856 = vlog2.pop %v855
        %v857 = vmul.f32 %v856, 0.6931472
        %v858 = vmul.f32 -0.5, %v694
        %v859 = vadd.f32 %v858, 1.0
        %v860 = vmul.f32 %v859, %v694
        %v861 = vand.u32 2147483647, %v694
        %vm862 = vcmp.lt.f32.partialorder %v861, 0.0004427343
        %v863 = vsel %vm862, %v860, %v857
        %v864 = vadd.f32 %v696, 1.0
        %v865 = vlog2.pop %v864
        %v866 = vmul.f32 %v865, 0.6931472
        %v867 = vmul.f32 -0.5, %v696
        %v868 = vadd.f32 %v867, 1.0
        %v869 = vmul.f32 %v868, %v696
        %v870 = vand.u32 2147483647, %v696
        %vm871 = vcmp.lt.f32.partialorder %v870, 0.0004427343
        %v872 = vsel %vm871, %v869, %v866
        %v873 = vadd.f32 %v698, 1.0
        %v874 = vlog2.pop %v873
        %v875 = vmul.f32 %v874, 0.6931472
        %v876 = vmul.f32 -0.5, %v698
        %v877 = vadd.f32 %v876, 1.0
        %v878 = vmul.f32 %v877, %v698
        %v879 = vand.u32 2147483647, %v698
        %vm880 = vcmp.lt.f32.partialorder %v879, 0.0004427343
        %v881 = vsel %vm880, %v878, %v875
        %v882 = vadd.f32 %v700, 1.0
        %v883 = vlog2.pop %v882
        %v884 = vmul.f32 %v883, 0.6931472
        %v885 = vmul.f32 -0.5, %v700
        %v886 = vadd.f32 %v885, 1.0
        %v887 = vmul.f32 %v886, %v700
        %v888 = vand.u32 2147483647, %v700
        %vm889 = vcmp.lt.f32.partialorder %v888, 0.0004427343
        %v890 = vsel %vm889, %v887, %v884
        %v891 = vadd.f32 %v702, 1.0
        %v892 = vlog2.pop %v891
        %v893 = vmul.f32 %v892, 0.6931472
        %v894 = vmul.f32 -0.5, %v702
        %v895 = vadd.f32 %v894, 1.0
        %v896 = vmul.f32 %v895, %v702
        %v897 = vand.u32 2147483647, %v702
        %vm898 = vcmp.lt.f32.partialorder %v897, 0.0004427343
        %v899 = vsel %vm898, %v896, %v893
        %v900 = vadd.f32 %v704, 1.0
        %v901 = vlog2.pop %v900
        %v902 = vmul.f32 %v901, 0.6931472
        %v903 = vmul.f32 -0.5, %v704
        %v904 = vadd.f32 %v903, 1.0
        %v905 = vmul.f32 %v904, %v704
        %v906 = vand.u32 2147483647, %v704
        %vm907 = vcmp.lt.f32.partialorder %v906, 0.0004427343
        %v908 = vsel %vm907, %v905, %v902
        %v909 = vadd.f32 %v706, 1.0
        %v910 = vlog2.pop %v909
        %v911 = vmul.f32 %v910, 0.6931472
        %v912 = vmul.f32 -0.5, %v706
        %v913 = vadd.f32 %v912, 1.0
        %v914 = vmul.f32 %v913, %v706
        %v915 = vand.u32 2147483647, %v706
        %vm916 = vcmp.lt.f32.partialorder %v915, 0.0004427343
        %v917 = vsel %vm916, %v914, %v911
        %v918 = vadd.f32 %v708, 1.0
        %v919 = vlog2.pop %v918
        %v920 = vmul.f32 %v919, 0.6931472
        %v921 = vmul.f32 -0.5, %v708
        %v922 = vadd.f32 %v921, 1.0
        %v923 = vmul.f32 %v922, %v708
        %v924 = vand.u32 2147483647, %v708
        %vm925 = vcmp.lt.f32.partialorder %v924, 0.0004427343
        %v926 = vsel %vm925, %v923, %v920
        %v927 = vadd.f32 %v710, 1.0
        %v928 = vlog2.pop %v927
        %v929 = vmul.f32 %v928, 0.6931472
        %v930 = vmul.f32 -0.5, %v710
        %v931 = vadd.f32 %v930, 1.0
        %v932 = vmul.f32 %v931, %v710
        %v933 = vand.u32 2147483647, %v710
        %vm934 = vcmp.lt.f32.partialorder %v933, 0.0004427343
        %v935 = vsel %vm934, %v932, %v929
        %v936 = vadd.f32 %v712, 1.0
        %v937 = vlog2.pop %v936
        %v938 = vmul.f32 %v937, 0.6931472
        %v939 = vmul.f32 -0.5, %v712
        %v940 = vadd.f32 %v939, 1.0
        %v941 = vmul.f32 %v940, %v712
        %v942 = vand.u32 2147483647, %v712
        %vm943 = vcmp.lt.f32.partialorder %v942, 0.0004427343
        %v944 = vsel %vm943, %v941, %v938
        %v945 = vadd.f32 %v714, 1.0
        %v946 = vlog2.pop %v945
        %v947 = vmul.f32 %v946, 0.6931472
        %v948 = vmul.f32 -0.5, %v714
        %v949 = vadd.f32 %v948, 1.0
        %v950 = vmul.f32 %v949, %v714
        %v951 = vand.u32 2147483647, %v714
        %vm952 = vcmp.lt.f32.partialorder %v951, 0.0004427343
        %v953 = vsel %vm952, %v950, %v947
        %v954 = vadd.f32 %v716, 1.0
        %v955 = vlog2.pop %v954
        %v956 = vmul.f32 %v955, 0.6931472
        %v957 = vmul.f32 -0.5, %v716
        %v958 = vadd.f32 %v957, 1.0
        %v959 = vmul.f32 %v958, %v716
        %v960 = vand.u32 2147483647, %v716
        %vm961 = vcmp.lt.f32.partialorder %v960, 0.0004427343
        %v962 = vsel %vm961, %v959, %v956
        %v963 = vadd.f32 %v718, 1.0
        %v964 = vlog2.pop %v963
        %v965 = vmul.f32 %v964, 0.6931472
        %v966 = vmul.f32 -0.5, %v718
        %v967 = vadd.f32 %v966, 1.0
        %v968 = vmul.f32 %v967, %v718
        %v969 = vand.u32 2147483647, %v718
        %vm970 = vcmp.lt.f32.partialorder %v969, 0.0004427343
        %v971 = vsel %vm970, %v968, %v965
        %v972 = vadd.f32 %v720, 1.0
        %v973 = vlog2.pop %v972
        %v974 = vmul.f32 %v973, 0.6931472
        %v975 = vmul.f32 -0.5, %v720
        %v976 = vadd.f32 %v975, 1.0
        %v977 = vmul.f32 %v976, %v720
        %v978 = vand.u32 2147483647, %v720
        %vm979 = vcmp.lt.f32.partialorder %v978, 0.0004427343
        %v980 = vsel %vm979, %v977, %v974
        %v981 = vadd.f32 %v722, 1.0
        %v982 = vlog2.pop %v981
        %v983 = vmul.f32 %v982, 0.6931472
        %v984 = vmul.f32 -0.5, %v722
        %v985 = vadd.f32 %v984, 1.0
        %v986 = vmul.f32 %v985, %v722
        %v987 = vand.u32 2147483647, %v722
        %vm988 = vcmp.lt.f32.partialorder %v987, 0.0004427343
        %v989 = vsel %vm988, %v986, %v983
        %v990 = vadd.f32 %v724, 1.0
        %v991 = vlog2.pop %v990
        %v992 = vmul.f32 %v991, 0.6931472
        %v993 = vmul.f32 -0.5, %v724
        %v994 = vadd.f32 %v993, 1.0
        %v995 = vmul.f32 %v994, %v724
        %v996 = vand.u32 2147483647, %v724
        %vm997 = vcmp.lt.f32.partialorder %v996, 0.0004427343
        %v998 = vsel %vm997, %v995, %v992
        %v999 = vadd.f32 %v726, 1.0
        %v1000 = vlog2.pop %v999
        %v1001 = vmul.f32 %v1000, 0.6931472
        %v1002 = vmul.f32 -0.5, %v726
        %v1003 = vadd.f32 %v1002, 1.0
        %v1004 = vmul.f32 %v1003, %v726
        %v1005 = vand.u32 2147483647, %v726
        %vm1006 = vcmp.lt.f32.partialorder %v1005, 0.0004427343
        %v1007 = vsel %vm1006, %v1004, %v1001
        %v1008 = vadd.f32 %v728, 1.0
        %v1009 = vlog2.pop %v1008
        %v1010 = vmul.f32 %v1009, 0.6931472
        %v1011 = vmul.f32 -0.5, %v728
        %v1012 = vadd.f32 %v1011, 1.0
        %v1013 = vmul.f32 %v1012, %v728
        %v1014 = vand.u32 2147483647, %v728
        %vm1015 = vcmp.lt.f32.partialorder %v1014, 0.0004427343
        %v1016 = vsel %vm1015, %v1013, %v1010
        %v1017 = vadd.f32 %v569, %v737
        %v1018 = vadd.f32 %v570, %v746
        %v1019 = vadd.f32 %v571, %v755
        %v1020 = vadd.f32 %v572, %v764
        %v1021 = vadd.f32 %v573, %v773
        %v1022 = vadd.f32 %v574, %v782
        %v1023 = vadd.f32 %v575, %v791
        %v1024 = vadd.f32 %v576, %v800
        %v1025 = vadd.f32 %v577, %v809
        %v1026 = vadd.f32 %v578, %v818
        %v1027 = vadd.f32 %v579, %v827
        %v1028 = vadd.f32 %v580, %v836
        %v1029 = vadd.f32 %v581, %v845
        %v1030 = vadd.f32 %v582, %v854
        %v1031 = vadd.f32 %v583, %v863
        %v1032 = vadd.f32 %v584, %v872
        %v1033 = vadd.f32 %v585, %v881
        %v1034 = vadd.f32 %v586, %v890
        %v1035 = vadd.f32 %v587, %v899
        %v1036 = vadd.f32 %v588, %v908
        %v1037 = vadd.f32 %v589, %v917
        %v1038 = vadd.f32 %v590, %v926
        %v1039 = vadd.f32 %v591, %v935
        %v1040 = vadd.f32 %v592, %v944
        %v1041 = vadd.f32 %v593, %v953
        %v1042 = vadd.f32 %v594, %v962
        %v1043 = vadd.f32 %v595, %v971
        %v1044 = vadd.f32 %v596, %v980
        %v1045 = vadd.f32 %v597, %v989
        %v1046 = vadd.f32 %v598, %v998
        %v1047 = vadd.f32 %v599, %v1007
        %v1048 = vadd.f32 %v600, %v1016
        %v1049 = vsub.f32 %v1017, 0.6931472
        %v1050 = vsub.f32 %v1018, 0.6931472
        %v1051 = vsub.f32 %v1019, 0.6931472
        %v1052 = vsub.f32 %v1020, 0.6931472
        %v1053 = vsub.f32 %v1021, 0.6931472
        %v1054 = vsub.f32 %v1022, 0.6931472
        %v1055 = vsub.f32 %v1023, 0.6931472
        %v1056 = vsub.f32 %v1024, 0.6931472
        %v1057 = vsub.f32 %v1025, 0.6931472
        %v1058 = vsub.f32 %v1026, 0.6931472
        %v1059 = vsub.f32 %v1027, 0.6931472
        %v1060 = vsub.f32 %v1028, 0.6931472
        %v1061 = vsub.f32 %v1029, 0.6931472
        %v1062 = vsub.f32 %v1030, 0.6931472
        %v1063 = vsub.f32 %v1031, 0.6931472
        %v1064 = vsub.f32 %v1032, 0.6931472
        %v1065 = vsub.f32 %v1033, 0.6931472
        %v1066 = vsub.f32 %v1034, 0.6931472
        %v1067 = vsub.f32 %v1035, 0.6931472
        %v1068 = vsub.f32 %v1036, 0.6931472
        %v1069 = vsub.f32 %v1037, 0.6931472
        %v1070 = vsub.f32 %v1038, 0.6931472
        %v1071 = vsub.f32 %v1039, 0.6931472
        %v1072 = vsub.f32 %v1040, 0.6931472
        %v1073 = vsub.f32 %v1041, 0.6931472
        %v1074 = vsub.f32 %v1042, 0.6931472
        %v1075 = vsub.f32 %v1043, 0.6931472
        %v1076 = vsub.f32 %v1044, 0.6931472
        %v1077 = vsub.f32 %v1045, 0.6931472
        %v1078 = vsub.f32 %v1046, 0.6931472
        %v1079 = vsub.f32 %v1047, 0.6931472
        %v1080 = vsub.f32 %v1048, 0.6931472
        %v1081 = vld [vmem:[%s4] sm:$0xff]
        %v1082 = vld [vmem:[%s4 + $0x8] sm:$0xff]
        %v1083 = vld [vmem:[%s4 + $0x10] sm:$0xff]
        %v1084 = vld [vmem:[%s4 + $0x18] sm:$0xff]
        %v1085 = vld [vmem:[%s5] sm:$0x1]
        %v1087 = vperm.slane %v1085, 0
        %v1090 = vsel %vm359, %v1049, 0
        %v1093 = vsel %vm359, %v1050, 0
        %v1096 = vsel %vm359, %v1051, 0
        %v1099 = vsel %vm359, %v1052, 0
        %v1102 = vsel %vm359, %v1053, 0
        %v1105 = vsel %vm359, %v1054, 0
        %v1108 = vsel %vm359, %v1055, 0
        %v1111 = vsel %vm359, %v1056, 0
        %v1114 = vsel %vm359, %v1057, 0
        %v1117 = vsel %vm359, %v1058, 0
        %v1120 = vsel %vm359, %v1059, 0
        %v1123 = vsel %vm359, %v1060, 0
        %v1126 = vsel %vm359, %v1061, 0
        %v1129 = vsel %vm359, %v1062, 0
        %v1132 = vsel %vm359, %v1063, 0
        %v1135 = vsel %vm359, %v1064, 0
        %v1138 = vsel %vm359, %v1065, 0
        %v1141 = vsel %vm359, %v1066, 0
        %v1144 = vsel %vm359, %v1067, 0
        %v1147 = vsel %vm359, %v1068, 0
        %v1150 = vsel %vm359, %v1069, 0
        %v1153 = vsel %vm359, %v1070, 0
        %v1156 = vsel %vm359, %v1071, 0
        %v1159 = vsel %vm359, %v1072, 0
        %v1162 = vsel %vm359, %v1073, 0
        %v1165 = vsel %vm359, %v1074, 0
        %v1168 = vsel %vm359, %v1075, 0
        %v1171 = vsel %vm359, %v1076, 0
        %v1174 = vsel %vm359, %v1077, 0
        %v1177 = vsel %vm359, %v1078, 0
        %v1180 = vsel %vm359, %v1079, 0
        %v1183 = vsel %vm359, %v1080, 0
        %1185 = vmatpush.msra.mxu0 0.0
        %1186 = vmatpush.msra.mxu0 0.0
        %1187 = vmatpush.msra.mxu0 0.0
        %1188 = vmatpush.msra.mxu0 0.0
        %1189 = vmatpush.msra.mxu0 0.0
        %1190 = vmatpush.msra.mxu0 0.0
        %1191 = vmatpush.msra.mxu0 0.0
        %1192 = vmatpush.msra.mxu0 0.0
        %1193 = vmatpush.msra.mxu0 0.0
        %1194 = vmatpush.msra.mxu0 0.0
        %1195 = vmatpush.msra.mxu0 0.0
        %1196 = vmatpush.msra.mxu0 0.0
        %1197 = vmatpush.msra.mxu0 %v1084
        %1198 = vmatpush.msra.mxu0 %v1083
        %1199 = vmatpush.msra.mxu0 %v1082
        %1200 = vmatpush.msra.mxu0 %v1081
        %1201 = vmatmul.f32.gmra.mxu0 %v1090
        %v1202 = vpop.f32.mrf.mxu0
        %v1203 = vadd.f32 %v1087, %v1202
        %1204 = vmatmul.f32.gmra.mxu0 %v1093
        %v1205 = vpop.f32.mrf.mxu0
        %v1206 = vadd.f32 %v1087, %v1205
        %1207 = vmatmul.f32.gmra.mxu0 %v1096
        %v1208 = vpop.f32.mrf.mxu0
        %v1209 = vadd.f32 %v1087, %v1208
        %1210 = vmatmul.f32.gmra.mxu0 %v1099
        %v1211 = vpop.f32.mrf.mxu0
        %v1212 = vadd.f32 %v1087, %v1211
        %1213 = vmatmul.f32.gmra.mxu0 %v1102
        %v1214 = vpop.f32.mrf.mxu0
        %v1215 = vadd.f32 %v1087, %v1214
        %1216 = vmatmul.f32.gmra.mxu0 %v1105
        %v1217 = vpop.f32.mrf.mxu0
        %v1218 = vadd.f32 %v1087, %v1217
        %1219 = vmatmul.f32.gmra.mxu0 %v1108
        %v1220 = vpop.f32.mrf.mxu0
        %v1221 = vadd.f32 %v1087, %v1220
        %1222 = vmatmul.f32.gmra.mxu0 %v1111
        %v1223 = vpop.f32.mrf.mxu0
        %v1224 = vadd.f32 %v1087, %v1223
        %1225 = vmatmul.f32.gmra.mxu0 %v1114
        %v1226 = vpop.f32.mrf.mxu0
        %v1227 = vadd.f32 %v1087, %v1226
        %1228 = vmatmul.f32.gmra.mxu0 %v1117
        %v1229 = vpop.f32.mrf.mxu0
        %v1230 = vadd.f32 %v1087, %v1229
        %1231 = vmatmul.f32.gmra.mxu0 %v1120
        %v1232 = vpop.f32.mrf.mxu0
        %v1233 = vadd.f32 %v1087, %v1232
        %1234 = vmatmul.f32.gmra.mxu0 %v1123
        %v1235 = vpop.f32.mrf.mxu0
        %v1236 = vadd.f32 %v1087, %v1235
        %1237 = vmatmul.f32.gmra.mxu0 %v1126
        %v1238 = vpop.f32.mrf.mxu0
        %v1239 = vadd.f32 %v1087, %v1238
        %1240 = vmatmul.f32.gmra.mxu0 %v1129
        %v1241 = vpop.f32.mrf.mxu0
        %v1242 = vadd.f32 %v1087, %v1241
        %1243 = vmatmul.f32.gmra.mxu0 %v1132
        %v1244 = vpop.f32.mrf.mxu0
        %v1245 = vadd.f32 %v1087, %v1244
        %1246 = vmatmul.f32.gmra.mxu0 %v1135
        %v1247 = vpop.f32.mrf.mxu0
        %v1248 = vadd.f32 %v1087, %v1247
        %1249 = vmatmul.f32.gmra.mxu0 %v1138
        %v1250 = vpop.f32.mrf.mxu0
        %v1251 = vadd.f32 %v1087, %v1250
        %1252 = vmatmul.f32.gmra.mxu0 %v1141
        %v1253 = vpop.f32.mrf.mxu0
        %v1254 = vadd.f32 %v1087, %v1253
        %1255 = vmatmul.f32.gmra.mxu0 %v1144
        %v1256 = vpop.f32.mrf.mxu0
        %v1257 = vadd.f32 %v1087, %v1256
        %1258 = vmatmul.f32.gmra.mxu0 %v1147
        %v1259 = vpop.f32.mrf.mxu0
        %v1260 = vadd.f32 %v1087, %v1259
        %1261 = vmatmul.f32.gmra.mxu0 %v1150
        %v1262 = vpop.f32.mrf.mxu0
        %v1263 = vadd.f32 %v1087, %v1262
        %1264 = vmatmul.f32.gmra.mxu0 %v1153
        %v1265 = vpop.f32.mrf.mxu0
        %v1266 = vadd.f32 %v1087, %v1265
        %1267 = vmatmul.f32.gmra.mxu0 %v1156
        %v1268 = vpop.f32.mrf.mxu0
        %v1269 = vadd.f32 %v1087, %v1268
        %1270 = vmatmul.f32.gmra.mxu0 %v1159
        %v1271 = vpop.f32.mrf.mxu0
        %v1272 = vadd.f32 %v1087, %v1271
        %1273 = vmatmul.f32.gmra.mxu0 %v1162
        %v1274 = vpop.f32.mrf.mxu0
        %v1275 = vadd.f32 %v1087, %v1274
        %1276 = vmatmul.f32.gmra.mxu0 %v1165
        %v1277 = vpop.f32.mrf.mxu0
        %v1278 = vadd.f32 %v1087, %v1277
        %1279 = vmatmul.f32.gmra.mxu0 %v1168
        %v1280 = vpop.f32.mrf.mxu0
        %v1281 = vadd.f32 %v1087, %v1280
        %1282 = vmatmul.f32.gmra.mxu0 %v1171
        %v1283 = vpop.f32.mrf.mxu0
        %v1284 = vadd.f32 %v1087, %v1283
        %1285 = vmatmul.f32.gmra.mxu0 %v1174
        %v1286 = vpop.f32.mrf.mxu0
        %v1287 = vadd.f32 %v1087, %v1286
        %1288 = vmatmul.f32.gmra.mxu0 %v1177
        %v1289 = vpop.f32.mrf.mxu0
        %v1290 = vadd.f32 %v1087, %v1289
        %1291 = vmatmul.f32.gmra.mxu0 %v1180
        %v1292 = vpop.f32.mrf.mxu0
        %v1293 = vadd.f32 %v1087, %v1292
        %1294 = vmatmul.f32.gmra.mxu0 %v1183
        %v1295 = vpop.f32.mrf.mxu0
        %v1296 = vadd.f32 %v1087, %v1295
        %1297 = vdwg.mxu0
        %v1298 = vld [vmem:[%s311] sm:$0x3]
        %v1299 = vlaneseq
        %v1300 = vshrl.u32 %v1299, 7
        %v1301 = vperm.slane %v1298, 0
        %v1302 = vperm.slane %v1298, 1
        %vm1303 = vcmp.eq.s32.totalorder %v1301, %v1300
        %vm1304 = vcmp.eq.s32.totalorder %v1302, %v1300
        %v1305 = vsel %vm1303, 1, 0
        %v1306 = vsel %vm1304, 1, 0
        %v1307 = vcvt.s32.f32 %v1305
        %v1308 = vcvt.s32.f32 %v1306
        %v1309 = vsel %vm359, %v1203, 1.0
        %v1310 = vsel %vm359, %v1206, 1.0
        %v1311 = vsel %vm359, %v1209, 1.0
        %v1312 = vsel %vm359, %v1212, 1.0
        %v1313 = vsel %vm359, %v1215, 1.0
        %v1314 = vsel %vm359, %v1218, 1.0
        %v1315 = vsel %vm359, %v1221, 1.0
        %v1316 = vsel %vm359, %v1224, 1.0
        %v1317 = vsel %vm359, %v1227, 1.0
        %v1318 = vsel %vm359, %v1230, 1.0
        %v1319 = vsel %vm359, %v1233, 1.0
        %v1320 = vsel %vm359, %v1236, 1.0
        %v1321 = vsel %vm359, %v1239, 1.0
        %v1322 = vsel %vm359, %v1242, 1.0
        %v1323 = vsel %vm359, %v1245, 1.0
        %v1324 = vsel %vm359, %v1248, 1.0
        %v1325 = vsel %vm359, %v1251, 1.0
        %v1326 = vsel %vm359, %v1254, 1.0
        %v1327 = vsel %vm359, %v1257, 1.0
        %v1328 = vsel %vm359, %v1260, 1.0
        %v1329 = vsel %vm359, %v1263, 1.0
        %v1330 = vsel %vm359, %v1266, 1.0
        %v1331 = vsel %vm359, %v1269, 1.0
        %v1332 = vsel %vm359, %v1272, 1.0
        %v1333 = vsel %vm359, %v1275, 1.0
        %v1334 = vsel %vm359, %v1278, 1.0
        %v1335 = vsel %vm359, %v1281, 1.0
        %v1336 = vsel %vm359, %v1284, 1.0
        %v1337 = vsel %vm359, %v1287, 1.0
        %v1338 = vsel %vm359, %v1290, 1.0
        %v1339 = vsel %vm359, %v1293, 1.0
        %v1340 = vsel %vm359, %v1296, 1.0
        %v1341 = vld [vmem:[#allocation2] sm:$0xff]
        %1342 = vmatpush.msra.mxu0 %v1324
        %1343 = vmatpush.msra.mxu0 %v1323
        %1344 = vmatpush.msra.mxu0 %v1322
        %1345 = vmatpush.msra.mxu0 %v1321
        %1346 = vmatpush.msra.mxu0 %v1320
        %1347 = vmatpush.msra.mxu0 %v1319
        %1348 = vmatpush.msra.mxu0 %v1318
        %1349 = vmatpush.msra.mxu0 %v1317
        %1350 = vmatpush.msra.mxu0 %v1316
        %1351 = vmatpush.msra.mxu0 %v1315
        %1352 = vmatpush.msra.mxu0 %v1314
        %1353 = vmatpush.msra.mxu0 %v1313
        %1354 = vmatpush.msra.mxu0 %v1312
        %1355 = vmatpush.msra.mxu0 %v1311
        %1356 = vmatpush.msra.mxu0 %v1310
        %1357 = vmatpush.msra.mxu0 %v1309
        %1358 = vmatmul.f32.gmra.mxu0 %v1307
        %v1359 = vpop.f32.mrf.mxu0
        %v1360 = vadd.f32 0.0, %v1359
        %1361 = vdwg.mxu0
        %1362 = vmatpush.msra.mxu0 %v1340
        %1363 = vmatpush.msra.mxu0 %v1339
        %1364 = vmatpush.msra.mxu0 %v1338
        %1365 = vmatpush.msra.mxu0 %v1337
        %1366 = vmatpush.msra.mxu0 %v1336
        %1367 = vmatpush.msra.mxu0 %v1335
        %1368 = vmatpush.msra.mxu0 %v1334
        %1369 = vmatpush.msra.mxu0 %v1333
        %1370 = vmatpush.msra.mxu0 %v1332
        %1371 = vmatpush.msra.mxu0 %v1331
        %1372 = vmatpush.msra.mxu0 %v1330
        %1373 = vmatpush.msra.mxu0 %v1329
        %1374 = vmatpush.msra.mxu0 %v1328
        %1375 = vmatpush.msra.mxu0 %v1327
        %1376 = vmatpush.msra.mxu0 %v1326
        %1377 = vmatpush.msra.mxu0 %v1325
        %1378 = vmatmul.f32.gmra.mxu0 %v1308
        %v1379 = vpop.f32.mrf.mxu0
        %v1380 = vadd.f32 %v1360, %v1379
        %1381 = vdwg.mxu0
        %v1382 = vadd.f32 %v1341, %v1380
        %vm1383 = vcmask 269312
        %1384 = vst.msk [vmem:[#allocation2] sm:$0xff] %vm1383, %v1382
        %p1385 = scmp.eq.s32.totalorder %s20, 1
        // Predicated region
        $region57: #{tpu_custom_call.1} parent=51 // pred_check
          %p1386 = pneg %p1385
        $region58: #{tpu_custom_call.1} parent=51 // pred_check_branch
          %1388 = sbr.rel (%p1386) target = $region60
        $region59: #{tpu_custom_call.1} parent=51 // pred_region
          %v1389 = vld [vmem:[#allocation2] sm:$0xff]
          %v1390 = vmax.f32 %v1389, 1.0
          %1392 = vset.pattern.permute.xlu0 32
          %1393 = vperm.xlu0 %1392, %v1390
          %v1394 = vpop.permute.xlu0 %1393
          %v1396 = vrcp.pop %v1394
          %v1397 = vmul.f32 %v1394, %v1396
          %v1398 = vsub.f32 1.0, %v1397
          %v1399 = vmul.f32 %v1396, %v1398
          %v1400 = vadd.f32 %v1396, %v1399
          %vm1401 = vweird.f32 %v1394
          %vm1402 = vweird.f32 %v1396
          %vm1403 = vmor %vm1401, %vm1402
          %v1404 = vsel %vm1403, %v1396, %v1400
          %v1405 = vand.u32 2147483647, %v1394
          %vm1406 = vcmp.eq.f32.partialorder %v1405, 8.507059e+37
          %v1407 = vand.u32 %v1394, 2147483648
          %v1408 = vor.u32 1.1754944e-38, %v1407
          %v1409 = vsel %vm1406, %v1408, %v1404
          %v1410 = vmul.f32 %v1389, %v1409
          %v1411 = vld [vmem:[%s6] sm:$0xff]
          %v1412 = vld [vmem:[%s6 + $0x8] sm:$0xff]
          %v1413 = vld [vmem:[%s6 + $0x10] sm:$0xff]
          %v1414 = vld [vmem:[%s6 + $0x18] sm:$0xff]
          %v1415 = vld [vmem:[%s7] sm:$0x1]
          %v1417 = vperm.slane %v1415, 0
          %v1420 = vsel %vm359, %v1410, 0
          %1422 = vmatpush.msra.mxu0 0.0
          %1423 = vmatpush.msra.mxu0 0.0
          %1424 = vmatpush.msra.mxu0 0.0
          %1425 = vmatpush.msra.mxu0 0.0
          %1426 = vmatpush.msra.mxu0 0.0
          %1427 = vmatpush.msra.mxu0 0.0
          %1428 = vmatpush.msra.mxu0 0.0
          %1429 = vmatpush.msra.mxu0 0.0
          %1430 = vmatpush.msra.mxu0 0.0
          %1431 = vmatpush.msra.mxu0 0.0
          %1432 = vmatpush.msra.mxu0 0.0
          %1433 = vmatpush.msra.mxu0 0.0
          %1434 = vmatpush.msra.mxu0 %v1414
          %1435 = vmatpush.msra.mxu0 %v1413
          %1436 = vmatpush.msra.mxu0 %v1412
          %1437 = vmatpush.msra.mxu0 %v1411
          %1438 = vmatmul.f32.gmra.mxu0 %v1420
          %v1439 = vpop.f32.mrf.mxu0
          %v1440 = vadd.f32 %v1417, %v1439
          %1441 = vdwg.mxu0
          %1442 = vst [vmem:[#allocation3] sm:$0xff] %v1440
        $region60: #{tpu_custom_call.1} parent=51 // pred_fallthru
          _
        // Predicated region
        $region61: #{tpu_custom_call.1} parent=51 // pred_check
          %p1443 = pneg %p211
        $region62: #{tpu_custom_call.1} parent=51 // pred_check_branch
          %1445 = sbr.rel (%p1443) target = $region64
        $region63: #{tpu_custom_call.1} parent=51 // pred_region
          %1447 = vsyncadd [#allocation4], 0
          %s1449 = sshll.u32 [#allocation3], 4
          %s1450 = int_to_ptr.vmem [resolvable:$true] %s1449
          %s1451 = sshll.u32 %s8, 4
          %s1452 = int_to_ptr.hbm [resolvable:$true] %s1451
          %1454 = dma.vmem_to_hbm [thread:$0]  %s1450, 128, %s1452, [#allocation4]
        $region64: #{tpu_custom_call.1} parent=51 // pred_fallthru
          _
        // Predicated region
        $region65: #{tpu_custom_call.1} parent=51 // pred_check
          %p1455 = pneg %p211
        $region66: #{tpu_custom_call.1} parent=51 // pred_check_branch
          %1457 = sbr.rel (%p1455) target = $region68
        $region67: #{tpu_custom_call.1} parent=51 // pred_region
          %1459 = dma.done [#allocation4], 128
        $region68: #{tpu_custom_call.1} parent=51 // pred_fallthru
          _
      $region52: #{tpu_custom_call.1} parent=5 // pred_fallthru
        _
      %p1460 = scmp.le.s32.totalorder 2, %s15
      // Predicated region
      $region69: #{tpu_custom_call.1} parent=5 // pred_check
        %p1461 = pneg %p1460
      $region70: #{tpu_custom_call.1} parent=5 // pred_check_branch
        %1463 = sbr.rel (%p1461) target = $region72
      $region71: #{tpu_custom_call.1} parent=5 // pred_region
        %s1464 = ssub.s32 %s15, 2
      $region72: #{tpu_custom_call.1} parent=5 // pred_fallthru
        _
    $region6: #{tpu_custom_call.1} parent=1 // loop_footer
      %s19 = sadd.s32 1, %s15
    $region7: #{tpu_custom_call.1} parent=1 // loop_footer_branch
      %14 = sbr.rel target = $region3
    $region8: #{tpu_custom_call.1} parent=1 // loop_exit
      _
    %1465 = vsyncpa [#allocation4], 1
    %s1466 = scalar_lea.sflag [#allocation4], 1
    %1467 = vsyncpa %s1466, 1

</llo_original>
